<compile_context>
chip_gen: v7x
topology: tpu7x:2x2x1
jax: 0.10.0
libtpu: 0.0.40
codegen_flags: <defaults>
</compile_context>

<pallas_src>
import functools

import jax
import jax.numpy as jnp
from jax.experimental import pallas as pl
from jax.experimental.pallas import tpu as pltpu

LANE = 128
MAX_BLOCK_ROWS = 8192   # (8192, 128) f32 = 4 MiB per input per pipeline buffer
ACC_ROWS = 8            # (8, 128) lane-dense partial-sum tile written per grid step
VMEM_LIMIT_BYTES = 40 << 20  # 16 MiB double-buffered inputs + headroom; fits all gens


def _round_up(x, m):
    return ((x + m - 1) // m) * m


def _bce_pair_kernel(block_rows, rows_valid, ragged, m1_ref, m2_ref, out_ref):
    m1 = m1_ref[...].astype(jnp.float32)
    m2 = m2_ref[...].astype(jnp.float32)

    # BCE(m1, (m2 > 0.5)) + BCE(m2, (m1 > 0.5)); select-before-log halves the
    # EUP work, clamp after the log matches torch's clamp to -100. The sign
    # flip (BCE = -log term) is applied once on the host-side scalar.
    p1 = jnp.where(m2 > 0.5, m1, 1.0 - m1)
    p2 = jnp.where(m1 > 0.5, m2, 1.0 - m2)
    total = jnp.maximum(jnp.log(p1), -100.0) + jnp.maximum(jnp.log(p2), -100.0)

    def _reduce(t):
        # (block_rows, 128) -> (8, 128): pure VALU adds across vregs (no XLU);
        # the tiny cross-lane reduce happens outside the kernel.
        return jnp.sum(t.reshape(-1, ACC_ROWS, LANE), axis=0)

    if ragged:
        last = pl.program_id(0) == pl.num_programs(0) - 1

        @pl.when(last)
        def _():
            # Rows past the real data hold undefined (Pallas-padded) values;
            # log() may produce NaN/-inf there, but jnp.where *selects* (it
            # does not multiply), so garbage never leaks into the sum. Do not
            # refactor this into a multiply-by-mask.
            row_ids = (pl.program_id(0) * block_rows
                       + jax.lax.broadcasted_iota(jnp.int32, total.shape, 0))
            out_ref[...] = _reduce(jnp.where(row_ids < rows_valid, total, 0.0))

        @pl.when(jnp.logical_not(last))
        def _():
            out_ref[...] = _reduce(total)
    else:
        out_ref[...] = _reduce(total)


def _bce_pair_sum_jnp(m1, m2):
    """Plain-jnp sum of the pairwise BCE terms (used only for the <128-elem tail)."""
    m1 = m1.astype(jnp.float32)
    m2 = m2.astype(jnp.float32)
    p1 = jnp.where(m2 > 0.5, m1, 1.0 - m1)
    p2 = jnp.where(m1 > 0.5, m2, 1.0 - m2)
    return -jnp.sum(jnp.maximum(jnp.log(p1), -100.0)
                    + jnp.maximum(jnp.log(p2), -100.0))


def binary_consistency_loss(mask1, mask2):
    assert mask1.shape == mask2.shape
    n = mask1.size

    m1_flat = mask1.reshape(-1)
    m2_flat = mask2.reshape(-1)

    # Lane-aligned prefix goes through the kernel; the (<128-element) tail is
    # handled with plain jnp below — no full-array pad/copy.
    rows = n // LANE
    n_main = rows * LANE
    tail = n - n_main

    bce_sum = jnp.float32(0.0)

    if rows > 0:
        m1 = m1_flat[:n_main].reshape(rows, LANE)
        m2 = m2_flat[:n_main].reshape(rows, LANE)

        # Big blocks for pipeline efficiency, but capped so mid-size inputs
        # still produce >= 2 grid tiles (v7x megacore sharding of the
        # "parallel" axis). Must stay a multiple of ACC_ROWS.
        block_rows = min(MAX_BLOCK_ROWS, _round_up(pl.cdiv(rows, 2), ACC_ROWS))
        num_tiles = pl.cdiv(rows, block_rows)
        ragged = (rows % block_rows) != 0

        kernel = functools.partial(_bce_pair_kernel, block_rows, rows, ragged)

        itemsize = jnp.dtype(mask1.dtype).itemsize
        cost = pl.CostEstimate(
            flops=8 * n_main,
            transcendentals=2 * n_main,
            bytes_accessed=2 * n_main * itemsize
                           + num_tiles * ACC_ROWS * LANE * 4,
        )

        partials = pl.pallas_call(
            kernel,
            out_shape=jax.ShapeDtypeStruct((num_tiles * ACC_ROWS, LANE),
                                           jnp.float32),
            grid_spec=pltpu.PrefetchScalarGridSpec(
                num_scalar_prefetch=0,
                grid=(num_tiles,),
                in_specs=[
                    pl.BlockSpec((block_rows, LANE), lambda i: (i, 0)),
                    pl.BlockSpec((block_rows, LANE), lambda i: (i, 0)),
                ],
                out_specs=pl.BlockSpec((ACC_ROWS, LANE), lambda i: (i, 0)),
            ),
            compiler_params=pltpu.CompilerParams(
                dimension_semantics=("parallel",),
                vmem_limit_bytes=VMEM_LIMIT_BYTES,
            ),
            cost_estimate=cost,
        )(m1, m2)

        # Kernel accumulates +log terms; BCE contribution is the negation.
        bce_sum = bce_sum - jnp.sum(partials)

    if tail:
        bce_sum = bce_sum + _bce_pair_sum_jnp(m1_flat[n_main:], m2_flat[n_main:])

    # mean(bce1) + mean(bce2) == (sum(bce1) + sum(bce2)) / N
    return bce_sum / n


def _reference(mask1, mask2):
    m1 = mask1.astype(jnp.float32)
    m2 = mask2.astype(jnp.float32)
    t2 = (m2 > 0.5).astype(jnp.float32)
    t1 = (m1 > 0.5).astype(jnp.float32)
    bce1 = -(t2 * jnp.maximum(jnp.log(m1), -100.0)
             + (1 - t2) * jnp.maximum(jnp.log(1 - m1), -100.0))
    bce2 = -(t1 * jnp.maximum(jnp.log(m2), -100.0)
             + (1 - t1) * jnp.maximum(jnp.log(1 - m2), -100.0))
    return jnp.mean(bce1) + jnp.mean(bce2)


if __name__ == "__main__":
    key = jax.random.PRNGKey(0)
    k1, k2 = jax.random.split(key)
    # Masks are probabilities in (0, 1); NCHW as in the PyTorch module.
    shape = (2, 4, 16, 16)
    eps = 1e-4
    mask1 = jax.random.uniform(k1, shape, jnp.float32, minval=eps, maxval=1.0 - eps)
    mask2 = jax.random.uniform(k2, shape, jnp.float32, minval=eps, maxval=1.0 - eps)

    loss = jax.jit(binary_consistency_loss)(mask1, mask2)
    loss = jax.block_until_ready(loss)

    ref = _reference(mask1, mask2)
    assert jnp.allclose(loss, ref, rtol=1e-5, atol=1e-5), (loss, ref)
    print("KERNEL_OK")
</pallas_src>

<mosaic_0001>
module attributes {stable_mosaic.version = 11 : i64} {
  func.func @_bce_pair_kernel(%arg0: i32, %arg1: memref<8x128xf32, #tpu.memory_space<vmem>>, %arg2: memref<8x128xf32, #tpu.memory_space<vmem>>, %arg3: memref<8x128xf32, #tpu.memory_space<vmem>>) attributes {dimension_semantics = [#tpu.dimension_semantics<parallel>], iteration_bounds = array<i64: 2>, scalar_prefetch = 0 : i64, scratch_operands = 0 : i64, tpu.core_type = #tpu.core_type<tc>, window_params = [{transform_indices = @transform_0, window_bounds = array<i64: 8, 128>}, {transform_indices = @transform_1, window_bounds = array<i64: 8, 128>}, {transform_indices = @transform_2, window_bounds = array<i64: 8, 128>}]} {
    %c0 = arith.constant 0 : index
    %c0_0 = arith.constant 0 : index
    %0 = vector.load %arg1[%c0, %c0_0] : memref<8x128xf32, #tpu.memory_space<vmem>>, vector<8x128xf32>
    %c0_1 = arith.constant 0 : index
    %c0_2 = arith.constant 0 : index
    %1 = vector.load %arg2[%c0_1, %c0_2] : memref<8x128xf32, #tpu.memory_space<vmem>>, vector<8x128xf32>
    %cst = arith.constant 5.000000e-01 : f32
    %2 = vector.broadcast %cst : f32 to vector<8x128xf32>
    %3 = arith.cmpf ogt, %1, %2 : vector<8x128xf32>
    %cst_3 = arith.constant 1.000000e+00 : f32
    %4 = vector.broadcast %cst_3 : f32 to vector<8x128xf32>
    %5 = arith.subf %4, %0 : vector<8x128xf32>
    %6 = arith.select %3, %0, %5 : vector<8x128xi1>, vector<8x128xf32>
    %cst_4 = arith.constant 5.000000e-01 : f32
    %7 = vector.broadcast %cst_4 : f32 to vector<8x128xf32>
    %8 = arith.cmpf ogt, %0, %7 : vector<8x128xf32>
    %cst_5 = arith.constant 1.000000e+00 : f32
    %9 = vector.broadcast %cst_5 : f32 to vector<8x128xf32>
    %10 = arith.subf %9, %1 : vector<8x128xf32>
    %11 = arith.select %8, %1, %10 : vector<8x128xi1>, vector<8x128xf32>
    %12 = math.log %6 : vector<8x128xf32>
    %cst_6 = arith.constant -1.000000e+02 : f32
    %13 = vector.broadcast %cst_6 : f32 to vector<8x128xf32>
    %14 = arith.maximumf %12, %13 : vector<8x128xf32>
    %15 = math.log %11 : vector<8x128xf32>
    %cst_7 = arith.constant -1.000000e+02 : f32
    %16 = vector.broadcast %cst_7 : f32 to vector<8x128xf32>
    %17 = arith.maximumf %15, %16 : vector<8x128xf32>
    %18 = arith.addf %14, %17 : vector<8x128xf32>
    %19 = vector.shape_cast %18 : vector<8x128xf32> to vector<1x8x128xf32>
    %cst_8 = arith.constant dense<0.000000e+00> : vector<8x128xf32>
    %20 = vector.multi_reduction <add>, %19, %cst_8 [0] : vector<1x8x128xf32> to vector<8x128xf32>
    %c0_9 = arith.constant 0 : index
    %c0_10 = arith.constant 0 : index
    %21 = vector.load %arg3[%c0_9, %c0_10] : memref<8x128xf32, #tpu.memory_space<vmem>>, vector<8x128xf32>
    tpu.vector_store %arg3[%c0_9, %c0_10], %20 {strides = array<i32>} : memref<8x128xf32, #tpu.memory_space<vmem>>, vector<8x128xf32>,
    return
  }
  func.func @transform_0(%arg0: i32) -> (i32, i32) {
    %c0_i32 = arith.constant 0 : i32
    %c0_i32_0 = arith.constant 0 : i32
    return %arg0, %c0_i32 : i32, i32
  }
  func.func @transform_1(%arg0: i32) -> (i32, i32) {
    %c0_i32 = arith.constant 0 : i32
    %c0_i32_0 = arith.constant 0 : i32
    return %arg0, %c0_i32 : i32, i32
  }
  func.func @transform_2(%arg0: i32) -> (i32, i32) {
    %c0_i32 = arith.constant 0 : i32
    %c0_i32_0 = arith.constant 0 : i32
    return %arg0, %c0_i32 : i32, i32
  }
}

</mosaic_0001>

<llo_original>
// kernel: binary_consistency_loss.1
$region0: #{binary_consistency_loss.1}
  #allocation0 [shape = 'u32[]', space=smem, size = 0x4, offset = 0x4, fixed_abs, tag = 'smem constant byte address 0x4 - core index']
  #allocation1 [shape = 'u32[144,128]{1,0:T(1,128)}', space=vmem, size = 0x12000, scoped, tag = 'internal scratch']
  %s0 = inlined_call_operand.vmem [shape: f32[16,128], index: 0, kind: input, shape index: {}]
  %s1 = inlined_call_operand.vmem [shape: f32[16,128], index: 1, kind: input, shape index: {}]
  %s2 = inlined_call_operand.vmem [shape: f32[16,128], index: 2, kind: output, shape index: {}]
  %s3 = sld [smem:[#allocation0]]
  $region41: #{binary_consistency_loss.1} parent=0
    _
  %s5 = ssub.s32 1, %s3
  %s6 = scalar_select 0, %s5, %s3
  loop: start=0, step=1, limit=4
  $region2: #{binary_consistency_loss.1} parent=0 // loop_pre_header
    _
  $region3: #{binary_consistency_loss.1} parent=0 // loop_header
    %s8 = sphi 0, %s12
    %p9 = scmp.ge.s32.totalorder %s8, 4
    %s18 = sphi 0, %s20
    %s21 = sphi 0, %s18
    %s22 = sphi 0, %s21
    %s38 = sphi 0, %s22
    %s44 = sphi 0, %s46
    %s47 = sphi 0, %s44
    %s48 = sphi 0, %s47
    %s64 = sphi 0, %s48
    %s70 = sphi 0, %s72
    %s73 = sphi 0, %s70
    %s74 = sphi 0, %s73
    %s90 = sphi 0, %s74
  $region4: #{binary_consistency_loss.1} parent=0 // loop_header_branch
    %11 = sbr.rel (%p9) target = $region8
  $region5: #{binary_consistency_loss.1} parent=0 // loop_body
    %s13 = ssub.s32 %s8, 1
    %s14 = ssub.s32 %s8, 2
    %s15 = sadd.s32 %s8, 1
    %s16 = ssub.s32 %s8, %s15
    %p17 = scmp.eq.s32.totalorder %s16, 0
    %s19 = sadd.s32 %s18, 1
    %s20 = scalar_select %p17, %s18, %s19
    %p23 = pneg %p17
    %p24 = scmp.eq.s32.totalorder %s8, 1
    %p25 = por %p23, %p24
    %p26 = scmp.ne.s32.totalorder %s18, %s21
    %p27 = scmp.eq.s32.totalorder %s8, 0
    %p28 = por %p26, %p27
    %p29 = scmp.ne.s32.totalorder %s18, %s21
    %p30 = scmp.eq.s32.totalorder %s13, 1
    %p31 = por %p29, %p30
    %p32 = scmp.ne.s32.totalorder %s21, %s22
    %p33 = scmp.eq.s32.totalorder %s13, 0
    %p34 = por %p32, %p33
    %p35 = scmp.ne.s32.totalorder %s21, %s22
    %p36 = scmp.eq.s32.totalorder %s14, 1
    %p37 = por %p35, %p36
    %p39 = scmp.ne.s32.totalorder %s22, %s38
    %p40 = scmp.eq.s32.totalorder %s14, 0
    %p41 = por %p39, %p40
    %s42 = ssub.s32 %s8, %s15
    %p43 = scmp.eq.s32.totalorder %s42, 0
    %s45 = sadd.s32 %s44, 1
    %s46 = scalar_select %p43, %s44, %s45
    %p49 = pneg %p43
    %p50 = scmp.eq.s32.totalorder %s8, 1
    %p51 = por %p49, %p50
    %p52 = scmp.ne.s32.totalorder %s44, %s47
    %p53 = scmp.eq.s32.totalorder %s8, 0
    %p54 = por %p52, %p53
    %p55 = scmp.ne.s32.totalorder %s44, %s47
    %p56 = scmp.eq.s32.totalorder %s13, 1
    %p57 = por %p55, %p56
    %p58 = scmp.ne.s32.totalorder %s47, %s48
    %p59 = scmp.eq.s32.totalorder %s13, 0
    %p60 = por %p58, %p59
    %p61 = scmp.ne.s32.totalorder %s47, %s48
    %p62 = scmp.eq.s32.totalorder %s14, 1
    %p63 = por %p61, %p62
    %p65 = scmp.ne.s32.totalorder %s48, %s64
    %p66 = scmp.eq.s32.totalorder %s14, 0
    %p67 = por %p65, %p66
    %s68 = ssub.s32 %s8, %s15
    %p69 = scmp.eq.s32.totalorder %s68, 0
    %s71 = sadd.s32 %s70, 1
    %s72 = scalar_select %p69, %s70, %s71
    %p75 = pneg %p69
    %p76 = scmp.eq.s32.totalorder %s8, 1
    %p77 = por %p75, %p76
    %p78 = scmp.ne.s32.totalorder %s70, %s73
    %p79 = scmp.eq.s32.totalorder %s8, 0
    %p80 = por %p78, %p79
    %p81 = scmp.ne.s32.totalorder %s70, %s73
    %p82 = scmp.eq.s32.totalorder %s13, 1
    %p83 = por %p81, %p82
    %p84 = scmp.ne.s32.totalorder %s73, %s74
    %p85 = scmp.eq.s32.totalorder %s13, 0
    %p86 = por %p84, %p85
    %p87 = scmp.ne.s32.totalorder %s73, %s74
    %p88 = scmp.eq.s32.totalorder %s14, 1
    %p89 = por %p87, %p88
    %p91 = scmp.ne.s32.totalorder %s74, %s90
    %p92 = scmp.eq.s32.totalorder %s14, 0
    %p93 = por %p91, %p92
    %p94 = scmp.le.s32.totalorder 1, %s8
    %p95 = scmp.lt.s32.totalorder %s8, 3
    %p96 = pnand %p94, %p95
    %p97 = pneg %p96
    // Predicated region
    $region9: #{binary_consistency_loss.1} parent=5 // pred_check
      _
    $region10: #{binary_consistency_loss.1} parent=5 // pred_check_branch
      %99 = sbr.rel (%p96) target = $region12
    $region11: #{binary_consistency_loss.1} parent=5 // pred_region
      %s100 = ssub.s32 %s8, 1
    $region12: #{binary_consistency_loss.1} parent=5 // pred_fallthru
      _
    %p101 = scmp.lt.s32.totalorder %s8, 2
    // Predicated region
    $region13: #{binary_consistency_loss.1} parent=5 // pred_check
      %p102 = pneg %p101
    $region14: #{binary_consistency_loss.1} parent=5 // pred_check_branch
      %104 = sbr.rel (%p102) target = $region16
    $region15: #{binary_consistency_loss.1} parent=5 // pred_region
      // Predicated region
      $region17: #{binary_consistency_loss.1} parent=15 // pred_check
        %p105 = pneg %p28
      $region18: #{binary_consistency_loss.1} parent=15 // pred_check_branch
        %107 = sbr.rel (%p105) target = $region20
      $region19: #{binary_consistency_loss.1} parent=15 // pred_region
        %p108 = scmp.lt.s32.totalorder %s8, 1
        %s109 = scalar_select %p108, %s8, 1
        %s110 = smul.addr %s109, 8
        %s111 = scalar_lea.vmem %s0, %s110
      $region20: #{binary_consistency_loss.1} parent=15 // pred_fallthru
        _
      // Predicated region
      $region21: #{binary_consistency_loss.1} parent=15 // pred_check
        %p112 = pneg %p54
      $region22: #{binary_consistency_loss.1} parent=15 // pred_check_branch
        %114 = sbr.rel (%p112) target = $region24
      $region23: #{binary_consistency_loss.1} parent=15 // pred_region
        %p115 = scmp.lt.s32.totalorder %s8, 1
        %s116 = scalar_select %p115, %s8, 1
        %s117 = smul.addr %s116, 8
        %s118 = scalar_lea.vmem %s1, %s117
      $region24: #{binary_consistency_loss.1} parent=15 // pred_fallthru
        _
    $region16: #{binary_consistency_loss.1} parent=5 // pred_fallthru
      _
    %p119 = scmp.le.s32.totalorder 1, %s8
    %p120 = scmp.lt.s32.totalorder %s8, 3
    %p121 = pnand %p119, %p120
    %p122 = pneg %p121
    // Predicated region
    $region25: #{binary_consistency_loss.1} parent=5 // pred_check
      _
    $region26: #{binary_consistency_loss.1} parent=5 // pred_check_branch
      %124 = sbr.rel (%p121) target = $region28
    $region27: #{binary_consistency_loss.1} parent=5 // pred_region
      %s125 = ssub.s32 %s8, 1
      %p126 = scmp.lt.s32.totalorder %s13, 1
      %s127 = scalar_select %p126, %s13, 1
      %s128 = smul.addr %s127, 8
      %s129 = scalar_lea.vmem %s0, %s128
      %p130 = pneg %p34
      %p131 = pneg %p31
      %p132 = scmp.lt.s32.totalorder %s13, 1
      %s133 = scalar_select %p132, %s13, 1
      %s134 = smul.addr %s133, 8
      %s135 = scalar_lea.vmem %s1, %s134
      %p136 = pneg %p60
      %p137 = pneg %p57
      %p138 = pneg %p86
      %p139 = pneg %p83
      %p140 = scmp.lt.s32.totalorder %s13, 1
      %s141 = scalar_select %p140, %s13, 1
      %s142 = smul.addr %s141, 8
      %s143 = scalar_lea.vmem %s2, %s142
      %p144 = scmp.lt.s32.totalorder %s13, 1
      %s145 = scalar_select %p144, %s13, 1
      %s146 = smul.addr %s145, 8
      %s147 = scalar_lea.vmem %s0, %s146
      %p148 = scmp.lt.s32.totalorder %s13, 1
      %s149 = scalar_select %p148, %s13, 1
      %s150 = smul.addr %s149, 8
      %s151 = scalar_lea.vmem %s1, %s150
      %p152 = scmp.lt.s32.totalorder %s13, 1
      %s153 = scalar_select %p152, %s13, 1
      %s154 = smul.addr %s153, 8
      %s155 = scalar_lea.vmem %s2, %s154
      %v156 = vld [vmem:[%s147] sm:$0xff]
      %v157 = vld [vmem:[%s151] sm:$0xff]
      %vm158 = vcmp.gt.f32.partialorder %v157, 0.5
      %v159 = vsub.f32 1.0, %v156
      %v160 = vsel %vm158, %v156, %v159
      %vm161 = vcmp.gt.f32.partialorder %v156, 0.5
      %v162 = vsub.f32 1.0, %v157
      %v163 = vsel %vm161, %v157, %v162
      %v164 = vlog2.pop %v160
      %v165 = vmul.f32 %v164, 0.6931472
      %v166 = vmax.f32 %v165, -100.0
      %v167 = vlog2.pop %v163
      %v168 = vmul.f32 %v167, 0.6931472
      %v169 = vmax.f32 %v168, -100.0
      %v170 = vadd.f32 %v166, %v169
      %v171 = vadd.f32 %v170, 0.0
      %172 = vst [vmem:[%s155] sm:$0xff] %v171
      %p173 = scmp.lt.s32.totalorder %s13, 1
      %s174 = scalar_select %p173, %s13, 1
      %s175 = smul.addr %s174, 8
      %s176 = scalar_lea.vmem %s2, %s175
      // Predicated region
      $region29: #{binary_consistency_loss.1} parent=27 // pred_check
        %p177 = pneg %p83
      $region30: #{binary_consistency_loss.1} parent=27 // pred_check_branch
        %179 = sbr.rel (%p177) target = $region32
      $region31: #{binary_consistency_loss.1} parent=27 // pred_region
        _
      $region32: #{binary_consistency_loss.1} parent=27 // pred_fallthru
        _
    $region28: #{binary_consistency_loss.1} parent=5 // pred_fallthru
      _
    %p180 = scmp.le.s32.totalorder 2, %s8
    // Predicated region
    $region33: #{binary_consistency_loss.1} parent=5 // pred_check
      %p181 = pneg %p180
    $region34: #{binary_consistency_loss.1} parent=5 // pred_check_branch
      %183 = sbr.rel (%p181) target = $region36
    $region35: #{binary_consistency_loss.1} parent=5 // pred_region
      %s184 = ssub.s32 %s8, 2
      // Predicated region
      $region37: #{binary_consistency_loss.1} parent=35 // pred_check
        %p185 = pneg %p89
      $region38: #{binary_consistency_loss.1} parent=35 // pred_check_branch
        %187 = sbr.rel (%p185) target = $region40
      $region39: #{binary_consistency_loss.1} parent=35 // pred_region
        %p188 = scmp.lt.s32.totalorder %s14, 1
        %s189 = scalar_select %p188, %s14, 1
        %s190 = smul.addr %s189, 8
        %s191 = scalar_lea.vmem %s2, %s190
      $region40: #{binary_consistency_loss.1} parent=35 // pred_fallthru
        _
    $region36: #{binary_consistency_loss.1} parent=5 // pred_fallthru
      _
  $region6: #{binary_consistency_loss.1} parent=0 // loop_footer
    %s12 = sadd.s32 1, %s8
  $region7: #{binary_consistency_loss.1} parent=0 // loop_footer_branch
    %7 = sbr.rel target = $region3
  $region8: #{binary_consistency_loss.1} parent=0 // loop_exit
    _

</llo_original>
